<compile_context>
chip_gen: v7x
topology: tpu7x:2x2x1
jax: 0.10.0
libtpu: 0.0.40
codegen_flags: <defaults>
</compile_context>

<pallas_src>
import functools

import numpy as np
import jax
import jax.numpy as jnp
from jax import lax
from jax.experimental import pallas as pl
from jax.experimental.pallas import tpu as pltpu

_LANES = 128
_SEP = 2      # zero separator lanes between lane-packed images (>= 1 required)
_GOFF = 8     # image row offset inside the activation scratch (8-aligned stores)


def _cdiv(a, b):
    return -(-a // b)


# -----------------------------------------------------------------------------
# pltpu.roll rotation-direction probe (fails loudly if ambiguous).
# -----------------------------------------------------------------------------
@functools.lru_cache(maxsize=None)
def _roll_sign():
    """+1 if pltpu.roll follows np.roll's sign convention, -1 if reversed."""

    def probe(x_ref, o_ref):
        o_ref[...] = pltpu.roll(x_ref[...], 1, axis=1)

    x = np.arange(8 * _LANES, dtype=np.float32).reshape(8, _LANES)
    y = pl.pallas_call(
        probe, out_shape=jax.ShapeDtypeStruct((8, _LANES), jnp.float32)
    )(jnp.asarray(x))
    y = np.asarray(jax.block_until_ready(y))
    if np.array_equal(y, np.roll(x, 1, axis=1)):
        return 1
    if np.array_equal(y, np.roll(x, -1, axis=1)):
        return -1
    raise RuntimeError("could not determine pltpu.roll rotation convention")


# -----------------------------------------------------------------------------
# Packing geometry
# -----------------------------------------------------------------------------
def _geometry(N, H, W, r):
    cs = W + _SEP                               # lane stride between images
    if cs <= _LANES:
        lp = _LANES
        gl = max(1, min(N, _LANES // cs))       # images packed along lanes
    else:
        lp = _LANES * _cdiv(cs, _LANES)
        cs = lp
        gl = 1
    s = _cdiv(N, gl)                            # grid steps
    os_ = _LANES * _cdiv(W * r, _LANES)         # per-image output lane slot
    return s, gl, cs, lp, os_


# -----------------------------------------------------------------------------
# Fused network kernel: GL lane-packed images per grid step.
# -----------------------------------------------------------------------------
def _net_kernel(x_ref, w1, b1, w2, b2, w3, b3, w4, b4, mask_ref, p_ref, r_ref,
                o_ref, act_ref, *, H, W, LP, GL, OS, r, roll_sign):
    f32 = jnp.float32
    bf16 = jnp.bfloat16
    Wr = W * r

    keep = mask_ref[...]                        # (H, LP) {0,1} f32, hoisted

    def lane_shift(x, kx):
        # tap[:, w] = x[:, w + kx - 1]  (cyclic; wrapped lanes are zero by the
        # packing invariant: separators / dead lanes are re-zeroed each layer).
        s = (roll_sign * (1 - kx)) % LP
        if s == 0:
            return x
        return pltpu.roll(x, s, axis=1)         # XLU lane rotate

    # Zero the guard rows of the activation scratch (rows GOFF-1 and GOFF+H).
    zrow = jnp.zeros((1, LP), f32)
    for ci in range(4):
        act_ref[ci, _GOFF - 1:_GOFF, :] = zrow
        act_ref[ci, _GOFF + H:_GOFF + H + 1, :] = zrow

    def conv_taps(get_in, cin, cout, w_ref, co0=0):
        """3x3 conv as VPU broadcast-FMAs; returns `cout` (H, LP) accumulators."""
        accs = [jnp.zeros((H, LP), f32) for _ in range(cout)]
        for ci in range(cin):
            for ky in range(3):
                base = get_in(ci, ky)                       # (H, LP) ref slice
                for kx in range(3):
                    tap = lane_shift(base, kx)
                    for co in range(cout):
                        wv = w_ref[(((co0 + co) * cin + ci) * 3 + ky) * 3 + kx]
                        accs[co] = accs[co] + wv * tap
        return accs

    def scratch_in(ci, ky):
        return act_ref[ci, _GOFF - 1 + ky:_GOFF - 1 + ky + H, :]

    def store_layer(accs, b_ref, act):
        for co, acc in enumerate(accs):
            y = acc + b_ref[co]
            if act == "relu":
                y = jnp.maximum(y, 0.0)
            else:                                           # hardtanh [0, 1]
                y = jnp.clip(y, 0.0, 1.0)
            # One vmul with the hoisted {0,1} mask re-zeroes separator / dead
            # lanes so the next conv's implicit zero padding stays exact.
            act_ref[co, _GOFF:_GOFF + H, :] = y * keep

    # conv1 (reads the lane-packed input canvas) .. conv3, staged in scratch.
    store_layer(conv_taps(lambda ci, ky: x_ref[0, ky:ky + H, :], 1, 4, w1),
                b1, "relu")
    store_layer(conv_taps(scratch_in, 4, 4, w2), b2, "clamp")
    store_layer(conv_taps(scratch_in, 4, 4, w3), b3, "relu")

    # conv4 + fused pixel shuffle.  One pass per output-row phase dy keeps only
    # r accumulators live.  Each pass is split into 3 exact bf16 parts so the
    # 0/1 selection matmuls on the MXU are lossless.
    parts = []
    for dy in range(r):
        accs = conv_taps(scratch_in, 4, r, w4, co0=dy * r)
        css = jnp.concatenate(
            [accs[dx] + b4[dy * r + dx] for dx in range(r)], axis=1)  # (H, r*LP)
        s1 = css.astype(bf16)
        rem = css - s1.astype(f32)
        s2 = rem.astype(bf16)
        s3 = (rem - s2.astype(f32)).astype(bf16)
        parts.append(jnp.concatenate([s1, s2, s3], axis=0))          # (3H, r*LP)

    for g in range(GL):
        pg = p_ref[g]                                     # (r*LP, OS) 0/1 bf16
        o_img = jnp.zeros((H * r, OS), f32)
        for dy in range(r):
            # lane interleave: (w, dx) -> w*r + dx for image g
            z = jnp.dot(parts[dy], pg, preferred_element_type=f32)   # (3H, OS)
            # row interleave: (h, dy) -> h*r + dy (also sums the 3 bf16 parts)
            o_img = o_img + jnp.dot(r_ref[dy], z.astype(bf16),
                                    preferred_element_type=f32)
        o_ref[g] = o_img[:, :Wr]                          # pixel-shuffled image


# -----------------------------------------------------------------------------
# Host wrapper (NCHW in / NCHW out, matching the PyTorch module)
# -----------------------------------------------------------------------------
def net_forward(x_nchw, params, *, upscale_factor, roll_sign):
    N, C, H, W = x_nchw.shape
    assert C == 1
    r = upscale_factor
    S, GL, CS, LP, OS = _geometry(N, H, W, r)
    HC = H + 2
    Wr = W * r
    NP = S * GL

    # Lane-pack GL images per canvas (single packing scatter; no halo pad).
    xs = x_nchw[:, 0]
    if NP > N:
        xs = jnp.concatenate([xs, jnp.zeros((NP - N, H, W), xs.dtype)], axis=0)
    xs = xs.reshape(S, GL, H, W).astype(jnp.float32)
    canvas = jnp.zeros((S, HC, LP), jnp.float32)
    for g in range(GL):
        canvas = canvas.at[:, 1:1 + H, g * CS:g * CS + W].set(xs[:, g])
    # TODO(synk): for zero host-side prep, DMA each raw image into the canvas
    # scratch inside the kernel (memory_space=pl.ANY + pltpu.make_async_copy).

    # Constant shuffle / mask operands, built with numpy at trace time.
    mask = np.zeros((H, LP), np.float32)
    pmat = np.zeros((GL, r * LP, OS), np.float32)
    rmat = np.zeros((r, H * r, 3 * H), np.float32)
    for g in range(GL):
        mask[:, g * CS:g * CS + W] = 1.0
        for dx in range(r):
            for w in range(W):
                pmat[g, dx * LP + g * CS + w, w * r + dx] = 1.0
    for dy in range(r):
        for h in range(H):
            for sp in range(3):
                rmat[dy, h * r + dy, sp * H + h] = 1.0
    mask = jnp.asarray(mask)
    pmat = jnp.asarray(pmat, jnp.bfloat16)   # 0/1 values are exact in bf16
    rmat = jnp.asarray(rmat, jnp.bfloat16)

    flat = []
    for name in ("conv1", "conv2", "conv3", "conv4"):
        w, b = params[name]                  # w: OIHW (Cout, Cin, 3, 3)
        flat += [w.reshape(-1).astype(jnp.float32), b.astype(jnp.float32)]

    kernel = functools.partial(_net_kernel, H=H, W=W, LP=LP, GL=GL, OS=OS, r=r,
                               roll_sign=roll_sign)
    smem = pl.BlockSpec(memory_space=pltpu.MemorySpace.SMEM)
    y = pl.pallas_call(
        kernel,
        out_shape=jax.ShapeDtypeStruct((NP, H * r, Wr), jnp.float32),
        grid_spec=pltpu.PrefetchScalarGridSpec(
            num_scalar_prefetch=0,
            grid=(S,),
            in_specs=[
                pl.BlockSpec((1, HC, LP), lambda s: (s, 0, 0)),
                smem, smem, smem, smem, smem, smem, smem, smem,
                pl.BlockSpec((H, LP), lambda s: (0, 0)),
                pl.BlockSpec((GL, r * LP, OS), lambda s: (0, 0, 0)),
                pl.BlockSpec((r, H * r, 3 * H), lambda s: (0, 0, 0)),
            ],
            out_specs=pl.BlockSpec((GL, H * r, Wr), lambda s: (s, 0, 0)),
            scratch_shapes=[pltpu.VMEM((4, _GOFF + H + 1, LP), jnp.float32)],
        ),
        compiler_params=pltpu.CompilerParams(
            dimension_semantics=("parallel",)),
    )(canvas, *flat, mask, pmat, rmat)

    # Kernel output is already pixel-shuffled -> only a (free) reshape remains.
    return y[:N].reshape(N, 1, H * r, Wr)


# -----------------------------------------------------------------------------
# Parameter init (deterministic orthogonal, like torch.nn.init.orthogonal_)
# -----------------------------------------------------------------------------
def orthogonal_init(key, shape_oihw, gain=1.0):
    rows = shape_oihw[0]
    cols = int(np.prod(shape_oihw[1:]))
    n, m = max(rows, cols), min(rows, cols)
    a = jax.random.normal(key, (n, m), dtype=jnp.float32)
    q, rmat = jnp.linalg.qr(a)
    q = q * jnp.sign(jnp.diagonal(rmat))
    if rows < cols:
        q = q.T
    return (gain * q[:rows, :cols]).reshape(shape_oihw)


def make_params(key, upscale_factor):
    r2 = upscale_factor ** 2
    relu_gain = float(np.sqrt(2.0))
    ks = jax.random.split(key, 8)
    shapes = {"conv1": (4, 1, 3, 3), "conv2": (4, 4, 3, 3),
              "conv3": (4, 4, 3, 3), "conv4": (r2, 4, 3, 3)}
    gains = {"conv1": relu_gain, "conv2": relu_gain,
             "conv3": relu_gain, "conv4": 1.0}
    params = {}
    for i, name in enumerate(("conv1", "conv2", "conv3", "conv4")):
        shp = shapes[name]
        w = orthogonal_init(ks[2 * i], shp, gains[name])
        bound = 1.0 / np.sqrt(shp[1] * shp[2] * shp[3])
        b = jax.random.uniform(ks[2 * i + 1], (shp[0],), minval=-bound,
                               maxval=bound, dtype=jnp.float32)
        params[name] = (w, b)
    return params


# -----------------------------------------------------------------------------
# Pure-JAX reference (for correctness check)
# -----------------------------------------------------------------------------
def _conv_ref(x_nchw, w_oihw, b):
    y = lax.conv_general_dilated(
        x_nchw, w_oihw, window_strides=(1, 1), padding="SAME",
        dimension_numbers=("NCHW", "OIHW", "NCHW"))
    return y + b.reshape(1, -1, 1, 1)


def net_forward_ref(x_nchw, params, upscale_factor):
    r = upscale_factor
    x = jnp.maximum(_conv_ref(x_nchw, *params["conv1"]), 0.0)
    x = jnp.clip(_conv_ref(x, *params["conv2"]), 0.0, 1.0)
    x = jnp.maximum(_conv_ref(x, *params["conv3"]), 0.0)
    x = _conv_ref(x, *params["conv4"])
    N, r2, H, W = x.shape
    x = x.reshape(N, r, r, H, W)
    x = jnp.transpose(x, (0, 3, 1, 4, 2))
    return x.reshape(N, 1, H * r, W * r)


if __name__ == "__main__":
    upscale_factor = 3
    N, H, W = 2, 16, 16

    key = jax.random.PRNGKey(0)
    k_params, k_x = jax.random.split(key)
    params = make_params(k_params, upscale_factor)
    x = jax.random.uniform(k_x, (N, 1, H, W), dtype=jnp.float32)

    sign = _roll_sign()
    fwd = jax.jit(functools.partial(net_forward, upscale_factor=upscale_factor,
                                    roll_sign=sign))
    out = jax.block_until_ready(fwd(x, params))
    assert out.shape == (N, 1, H * upscale_factor, W * upscale_factor), out.shape

    ref = net_forward_ref(x, params, upscale_factor)
    np.testing.assert_allclose(np.asarray(out), np.asarray(ref),
                               rtol=1e-5, atol=1e-5)

    print("KERNEL_OK")
</pallas_src>

<mosaic_0001>
module attributes {stable_mosaic.version = 11 : i64} {
  func.func @probe(%arg0: memref<8x128xf32, #tpu.memory_space<vmem>>, %arg1: memref<8x128xf32, #tpu.memory_space<vmem>>) attributes {dimension_semantics = [], scalar_prefetch = 0 : i64, scratch_operands = 0 : i64, tpu.core_type = #tpu.core_type<tc>} {
    %c0 = arith.constant 0 : index
    %c0_0 = arith.constant 0 : index
    %0 = vector.load %arg0[%c0, %c0_0] : memref<8x128xf32, #tpu.memory_space<vmem>>, vector<8x128xf32>
    %c1_i32 = arith.constant 1 : i32
    %1 = tpu.dynamic_rotate %0 by %c1_i32 dim 1 : vector<8x128xf32>, i32 -> vector<8x128xf32>
    %c0_1 = arith.constant 0 : index
    %c0_2 = arith.constant 0 : index
    %2 = vector.load %arg1[%c0_1, %c0_2] : memref<8x128xf32, #tpu.memory_space<vmem>>, vector<8x128xf32>
    tpu.vector_store %arg1[%c0_1, %c0_2], %1 {strides = array<i32>} : memref<8x128xf32, #tpu.memory_space<vmem>>, vector<8x128xf32>,
    return
  }
}

</mosaic_0001>

<llo_original>
// kernel: tpu_custom_call.1
$region0: #{tpu_custom_call.1}
  #allocation0 [shape = 'u32[]', space=smem, size = 0x4, offset = 0x4, fixed_abs, tag = 'smem constant byte address 0x4 - core index']
  #allocation1 [shape = 'u32[144,128]{1,0:T(1,128)}', space=vmem, size = 0x12000, scoped, tag = 'internal scratch']
  %s0 = inlined_call_operand.hbm [shape: f32[8,128], index: 0, kind: input, shape index: {}]
  %s1 = inlined_call_operand.hbm [shape: f32[8,128], index: 1, kind: output, shape index: {}]
  %s2 = sld [smem:[#allocation0]]
  $region18: #{tpu_custom_call.1} parent=0
    _
  %s4 = ssub.s32 1, %s2
  %s5 = scalar_select 0, %s4, %s2
  $region1: #{tpu_custom_call.1} parent=0
    #allocation2 [shape = 'u8[4096]{0}', space=vmem, size = 0x1000, scoped, tag = 'input window, operand 0, single buffered']
    #allocation3 [shape = 's32[1]{0}', space=sflag, size = 0x4, scoped, tag = 'scoped memory for tpu_custom_call.1']
    #allocation4 [shape = 's32[1]{0}', space=sflag, size = 0x4, scoped, tag = 'scoped memory for tpu_custom_call.1']
    #allocation5 [shape = 'u8[4096]{0}', space=vmem, size = 0x1000, scoped, tag = 'output window, operand 0, single buffered']
    %6 = vsyncpa [#allocation3], 0
    %7 = vsyncpa [#allocation4], 0
    // Predicated region
    $region2: #{tpu_custom_call.1} parent=1 // pred_check
      _
    $region3: #{tpu_custom_call.1} parent=1 // pred_check_branch
      %9 = sbr.rel (0) target = $region5
    $region4: #{tpu_custom_call.1} parent=1 // pred_region
      %s11 = ssub.s32 128, 128
      %12 = vsyncadd [#allocation3], %s11
      %s14 = sshll.u32 [#allocation2], 4
      %s15 = int_to_ptr.vmem [resolvable:$true] %s14
      %17 = dma.hbm_to_vmem [thread:$0]  %s0, 128, %s15, [#allocation3]
    $region5: #{tpu_custom_call.1} parent=1 // pred_fallthru
      _
    // Predicated region
    $region6: #{tpu_custom_call.1} parent=1 // pred_check
      _
    $region7: #{tpu_custom_call.1} parent=1 // pred_check_branch
      %19 = sbr.rel (0) target = $region9
    $region8: #{tpu_custom_call.1} parent=1 // pred_region
      %20 = dma.done [#allocation3], 128
    $region9: #{tpu_custom_call.1} parent=1 // pred_fallthru
      _
    %v21 = vld [vmem:[#allocation2] sm:$0xff]
    %22 = vrot.lane.b32.xlu0 %v21, 1
    %v23 = vpop.permute.xlu0 %22
    %24 = vst [vmem:[#allocation5] sm:$0xff] %v23
    // Predicated region
    $region10: #{tpu_custom_call.1} parent=1 // pred_check
      _
    $region11: #{tpu_custom_call.1} parent=1 // pred_check_branch
      %26 = sbr.rel (0) target = $region13
    $region12: #{tpu_custom_call.1} parent=1 // pred_region
      %s28 = ssub.s32 128, 128
      %29 = vsyncadd [#allocation4], %s28
      %s31 = sshll.u32 [#allocation5], 4
      %s32 = int_to_ptr.vmem [resolvable:$true] %s31
      %34 = dma.vmem_to_hbm [thread:$0]  %s32, 128, %s1, [#allocation4]
    $region13: #{tpu_custom_call.1} parent=1 // pred_fallthru
      _
    // Predicated region
    $region14: #{tpu_custom_call.1} parent=1 // pred_check
      _
    $region15: #{tpu_custom_call.1} parent=1 // pred_check_branch
      %36 = sbr.rel (0) target = $region17
    $region16: #{tpu_custom_call.1} parent=1 // pred_region
      %37 = dma.done [#allocation4], 128
    $region17: #{tpu_custom_call.1} parent=1 // pred_fallthru
      _
    %38 = vsyncpa [#allocation3], 1
    %39 = vsyncpa [#allocation4], 1

</llo_original>
